<compile_context>
chip_gen: v7x
topology: tpu7x:2x2x1
jax: 0.10.0
libtpu: 0.0.40
codegen_flags: <defaults>
</compile_context>

<pallas_src>
import functools

import numpy as np
import jax
import jax.numpy as jnp
from jax.experimental import pallas as pl
from jax.experimental.pallas import tpu as pltpu


# ---------------------------------------------------------------------------
# Deterministic parameter construction (hann window, combined DFT basis,
# HTK mel filterbank) — identical math to torchaudio defaults.
# ---------------------------------------------------------------------------
def _round_up(x: int, m: int) -> int:
    return ((x + m - 1) // m) * m


def _hann_window(win_length: int) -> np.ndarray:
    # torch.hann_window default: periodic=True
    n = np.arange(win_length, dtype=np.float64)
    return 0.5 - 0.5 * np.cos(2.0 * np.pi * n / win_length)


def _combined_dft_basis(n_fft: int, window: np.ndarray, n_freq: int,
                        nf_pad: int) -> np.ndarray:
    """Window-folded real-DFT basis [cos | sin], zero-padded to (n_fft, 2*nf_pad)."""
    n = np.arange(n_fft, dtype=np.float64)[:, None]
    k = np.arange(n_freq, dtype=np.float64)[None, :]
    ang = 2.0 * np.pi * n * k / n_fft
    w = window.astype(np.float64)[:, None]
    basis = np.zeros((n_fft, 2 * nf_pad), dtype=np.float32)
    basis[:, :n_freq] = (w * np.cos(ang)).astype(np.float32)
    basis[:, nf_pad:nf_pad + n_freq] = (w * np.sin(ang)).astype(np.float32)
    return basis


def _mel_filterbank(n_freqs: int, f_min: float, f_max: float, n_mels: int,
                    sample_rate: int, nf_pad: int, nm_pad: int) -> np.ndarray:
    """torchaudio.functional.melscale_fbanks (htk, norm=None), zero-padded."""
    def hz_to_mel(f):
        return 2595.0 * np.log10(1.0 + f / 700.0)

    def mel_to_hz(m):
        return 700.0 * (10.0 ** (m / 2595.0) - 1.0)

    all_freqs = np.linspace(0.0, sample_rate // 2, n_freqs)
    m_pts = np.linspace(hz_to_mel(f_min), hz_to_mel(f_max), n_mels + 2)
    f_pts = mel_to_hz(m_pts)
    f_diff = f_pts[1:] - f_pts[:-1]                       # (n_mels + 1,)
    slopes = f_pts[None, :] - all_freqs[:, None]          # (n_freqs, n_mels + 2)
    down = (-slopes[:, :-2]) / f_diff[:-1]
    up = slopes[:, 2:] / f_diff[1:]
    fb = np.maximum(0.0, np.minimum(down, up)).astype(np.float32)
    fb_pad = np.zeros((nf_pad, nm_pad), dtype=np.float32)
    fb_pad[:n_freqs, :n_mels] = fb
    return fb_pad


# ---------------------------------------------------------------------------
# Pallas kernel: one (batch, time-tile) grid point.
#   chunks_ref : (1, n_chunks_alloc, chunk)  full per-batch chunk array
#                (index_map constant over the time axis -> fetched once per b)
#   w_ref      : (r, chunk, 2*nf_pad)        combined [cos|sin] basis, row-split
#   fb_ref     : (nf_pad, nm_pad)            mel filterbank
#   out_ref    : (1, tt, nm_pad)             lane-dense log-mel tile
# ---------------------------------------------------------------------------
def _logmel_kernel(chunks_ref, w_ref, fb_ref, out_ref, *, tt, r, pad_extra):
    t = pl.program_id(1)
    f0 = pl.multiple_of(t * tt, 8)            # tt is a multiple of 8

    # Aligned dynamic-slice load of the overlapping chunk slab for this tile.
    slab = chunks_ref[0, pl.ds(f0, tt + pad_extra), :]    # (tt+pad_extra, chunk)

    # Windowed real DFT of all tt frames via r fused matmuls:
    #   frame f = [chunk f, chunk f+1, ..., chunk f+r-1]  (hop divides n_fft)
    d = jnp.dot(slab[0:tt], w_ref[0], preferred_element_type=jnp.float32)
    for j in range(1, r):
        d = d + jnp.dot(slab[j:j + tt], w_ref[j],
                        preferred_element_type=jnp.float32)

    nf_pad = d.shape[-1] // 2
    re = d[:, :nf_pad]
    im = d[:, nf_pad:]
    power = re * re + im * im                             # (tt, nf_pad), power=2.0

    mel = jnp.dot(power, fb_ref[...], preferred_element_type=jnp.float32)

    scale = np.float32(10.0 / np.log(10.0))               # 10*log10(x) = scale*ln(x)
    out_ref[0] = scale * jnp.log(jnp.maximum(mel, 1e-10))


# ---------------------------------------------------------------------------
# Wrapper
# ---------------------------------------------------------------------------
def log_mel_spectrogram(waveform: jnp.ndarray,
                        sample_rate: int = 16000,
                        n_fft: int = 400,
                        win_length=None,
                        hop_length=None,
                        n_mels: int = 80,
                        normalize_frq_bins: bool = True,
                        frame_tile: int = 256,
                        use_bf16: bool = False) -> jnp.ndarray:
    """waveform: (..., time) float32 -> (..., n_mels, T_frames) float32."""
    win_length = n_fft if win_length is None else win_length
    hop = win_length // 2 if hop_length is None else hop_length
    n_freq = n_fft // 2 + 1

    nf_pad = _round_up(n_freq, 128)
    nm_pad = _round_up(n_mels, 128)

    lead = waveform.shape[:-1]
    length = waveform.shape[-1]
    wave_2d = waveform.reshape((-1, length)).astype(jnp.float32)
    batch = wave_2d.shape[0]

    # --- deterministic parameters ------------------------------------------
    window = _hann_window(win_length)
    if win_length < n_fft:  # center-pad window to n_fft (torch.stft semantics)
        left = (n_fft - win_length) // 2
        window = np.pad(window, (left, n_fft - win_length - left))
    basis_np = _combined_dft_basis(n_fft, window, n_freq, nf_pad)
    fb_np = _mel_filterbank(n_freq, 0.0, sample_rate / 2.0, n_mels,
                            sample_rate, nf_pad, nm_pad)

    # --- framing: center=True reflect pad, then zero-copy hop-chunking ------
    pad = n_fft // 2
    padded = jnp.pad(wave_2d, ((0, 0), (pad, pad)), mode="reflect")
    lpad = padded.shape[-1]
    n_frames = 1 + (lpad - n_fft) // hop

    tt = _round_up(min(frame_tile, _round_up(n_frames, 8)), 8)
    n_t_tiles = -(-n_frames // tt)
    t_pad = n_t_tiles * tt

    if n_fft % hop == 0:
        # frame f = concat(chunk[f], ..., chunk[f+r-1]); no gather, 1x HBM traffic
        r = n_fft // hop
        chunk = hop
        pad_extra = 0 if r == 1 else _round_up(r - 1, 8)
        n_chunks_alloc = t_pad + pad_extra
        needed = n_chunks_alloc * chunk
        if needed > lpad:
            padded = jnp.pad(padded, ((0, 0), (0, needed - lpad)))
        chunks = padded[:, :needed].reshape(batch, n_chunks_alloc, chunk)
        basis = basis_np.reshape(r, chunk, 2 * nf_pad)
    else:
        # Fallback: hop does not divide n_fft -> strided gather framing (r=1).
        r = 1
        chunk = n_fft
        pad_extra = 0
        n_chunks_alloc = t_pad
        needed = (t_pad - 1) * hop + n_fft
        if needed > lpad:
            padded = jnp.pad(padded, ((0, 0), (0, needed - lpad)))
        idx = jnp.arange(t_pad)[:, None] * hop + jnp.arange(n_fft)[None, :]
        chunks = padded[:, idx]                           # (B, t_pad, n_fft)
        basis = basis_np.reshape(1, n_fft, 2 * nf_pad)

    basis = jnp.asarray(basis)
    fb = jnp.asarray(fb_np)
    if use_bf16:  # native-MXU path; keeps f32 accumulation via preferred_element_type
        chunks = chunks.astype(jnp.bfloat16)
        basis = basis.astype(jnp.bfloat16)

    # TODO(synk): for extremely long clips the full per-batch chunk block is kept
    # VMEM-resident; an overlapping-window DMA over the chunk axis would bound it.
    kernel = functools.partial(_logmel_kernel, tt=tt, r=r, pad_extra=pad_extra)

    out = pl.pallas_call(
        kernel,
        out_shape=jax.ShapeDtypeStruct((batch, t_pad, nm_pad), jnp.float32),
        grid=(batch, n_t_tiles),
        in_specs=[
            pl.BlockSpec((1, n_chunks_alloc, chunk), lambda b, t: (b, 0, 0)),
            pl.BlockSpec((r, chunk, 2 * nf_pad), lambda b, t: (0, 0, 0)),
            pl.BlockSpec((nf_pad, nm_pad), lambda b, t: (0, 0)),
        ],
        out_specs=pl.BlockSpec((1, tt, nm_pad), lambda b, t: (b, t, 0)),
        compiler_params=pltpu.CompilerParams(
            dimension_semantics=("parallel", "parallel"),
            vmem_limit_bytes=64 * 1024 * 1024),
    )(chunks, basis, fb)

    # Slice off padded frames / mel bins, transpose to (..., n_mels, T).
    logmel = jnp.transpose(out[:, :n_frames, :n_mels], (0, 2, 1))

    if normalize_frq_bins:
        # Per-frequency-bin normalization over time (tiny op; plain JAX).
        mean = jnp.mean(logmel, axis=-1, keepdims=True)
        centered = logmel - mean
        # torch.std default is unbiased (correction=1); guard T==1 to avoid /0.
        denom = max(n_frames - 1, 1)
        std = jnp.sqrt(jnp.sum(centered * centered, axis=-1, keepdims=True) / denom)
        logmel = centered / (std + 1e-10)

    return logmel.reshape(lead + (n_mels, n_frames))


if __name__ == "__main__":
    key = jax.random.PRNGKey(0)
    # Small shapes consistent with the module: batch=2, 512 audio samples,
    # n_fft=64, hop=32, n_mels=16  ->  output (2, 16, 17).
    waveform = jax.random.normal(key, (2, 512), dtype=jnp.float32)

    out = log_mel_spectrogram(
        waveform,
        sample_rate=16000,
        n_fft=64,
        win_length=64,
        hop_length=32,
        n_mels=16,
        normalize_frq_bins=True,
    )
    out = jax.block_until_ready(out)
    assert out.shape == (2, 16, 17), out.shape
    assert out.dtype == jnp.float32
    assert bool(jnp.all(jnp.isfinite(out)))
    print("KERNEL_OK")
</pallas_src>

<mosaic_0001>
module attributes {stable_mosaic.version = 11 : i64} {
  func.func @_logmel_kernel(%arg0: i32, %arg1: i32, %arg2: memref<1x32x32xf32, #tpu.memory_space<vmem>>, %arg3: memref<2x32x256xf32, #tpu.memory_space<vmem>>, %arg4: memref<128x128xf32, #tpu.memory_space<vmem>>, %arg5: memref<1x24x128xf32, #tpu.memory_space<vmem>>) attributes {dimension_semantics = [#tpu.dimension_semantics<parallel>, #tpu.dimension_semantics<parallel>], iteration_bounds = array<i64: 2, 1>, scalar_prefetch = 0 : i64, scratch_operands = 0 : i64, tpu.core_type = #tpu.core_type<tc>, window_params = [{transform_indices = @transform_0, window_bounds = array<i64: 1, 32, 32>}, {pipeline_mode = #tpu.pipeline_mode<synchronous>, transform_indices = @transform_1, window_bounds = array<i64: 2, 32, 256>}, {pipeline_mode = #tpu.pipeline_mode<synchronous>, transform_indices = @transform_2, window_bounds = array<i64: 128, 128>}, {transform_indices = @transform_3, window_bounds = array<i64: 1, 24, 128>}]} {
    %c24_i32 = arith.constant 24 : i32
    %0 = arith.muli %arg1, %c24_i32 : i32
    %1 = tpu.assume_multiple %0, 8 : i32
    %c0 = arith.constant 0 : index
    %2 = arith.index_cast %1 : i32 to index
    %c0_0 = arith.constant 0 : index
    %3 = vector.load %arg2[%c0, %2, %c0_0] : memref<1x32x32xf32, #tpu.memory_space<vmem>>, vector<1x32x32xf32>
    %4 = vector.shape_cast %3 : vector<1x32x32xf32> to vector<32x32xf32>
    %5 = vector.extract_strided_slice %4 {offsets = [0, 0], sizes = [24, 32], strides = [1, 1]} : vector<32x32xf32> to vector<24x32xf32>
    %c0_1 = arith.constant 0 : index
    %c0_2 = arith.constant 0 : index
    %c0_3 = arith.constant 0 : index
    %6 = vector.load %arg3[%c0_1, %c0_2, %c0_3] : memref<2x32x256xf32, #tpu.memory_space<vmem>>, vector<1x32x256xf32>
    %7 = vector.shape_cast %6 : vector<1x32x256xf32> to vector<32x256xf32>
    %cst = arith.constant dense<0.000000e+00> : vector<24x256xf32>
    %8 = tpu.matmul %5, %7, %cst {dimension_numbers = #tpu.dot_dimension_numbers<[1], [0], [0], [1], [0, 0, 1, 1], [], []>} : vector<24x32xf32>, vector<32x256xf32>, vector<24x256xf32> -> vector<24x256xf32>
    %9 = vector.extract_strided_slice %4 {offsets = [1, 0], sizes = [24, 32], strides = [1, 1]} : vector<32x32xf32> to vector<24x32xf32>
    %c1 = arith.constant 1 : index
    %c0_4 = arith.constant 0 : index
    %c0_5 = arith.constant 0 : index
    %10 = vector.load %arg3[%c1, %c0_4, %c0_5] : memref<2x32x256xf32, #tpu.memory_space<vmem>>, vector<1x32x256xf32>
    %11 = vector.shape_cast %10 : vector<1x32x256xf32> to vector<32x256xf32>
    %cst_6 = arith.constant dense<0.000000e+00> : vector<24x256xf32>
    %12 = tpu.matmul %9, %11, %cst_6 {dimension_numbers = #tpu.dot_dimension_numbers<[1], [0], [0], [1], [0, 0, 1, 1], [], []>} : vector<24x32xf32>, vector<32x256xf32>, vector<24x256xf32> -> vector<24x256xf32>
    %13 = arith.addf %8, %12 : vector<24x256xf32>
    %14 = vector.extract_strided_slice %13 {offsets = [0, 0], sizes = [24, 128], strides = [1, 1]} : vector<24x256xf32> to vector<24x128xf32>
    %15 = vector.extract_strided_slice %13 {offsets = [0, 128], sizes = [24, 128], strides = [1, 1]} : vector<24x256xf32> to vector<24x128xf32>
    %16 = arith.mulf %14, %14 : vector<24x128xf32>
    %17 = arith.mulf %15, %15 : vector<24x128xf32>
    %18 = arith.addf %16, %17 : vector<24x128xf32>
    %c0_7 = arith.constant 0 : index
    %c0_8 = arith.constant 0 : index
    %19 = vector.load %arg4[%c0_7, %c0_8] : memref<128x128xf32, #tpu.memory_space<vmem>>, vector<128x128xf32>
    %cst_9 = arith.constant dense<0.000000e+00> : vector<24x128xf32>
    %20 = tpu.matmul %18, %19, %cst_9 {dimension_numbers = #tpu.dot_dimension_numbers<[1], [0], [0], [1], [0, 0, 1, 1], [], []>} : vector<24x128xf32>, vector<128x128xf32>, vector<24x128xf32> -> vector<24x128xf32>
    %cst_10 = arith.constant 1.000000e-10 : f32
    %21 = vector.broadcast %cst_10 : f32 to vector<24x128xf32>
    %22 = arith.maximumf %20, %21 : vector<24x128xf32>
    %23 = math.log %22 : vector<24x128xf32>
    %cst_11 = arith.constant 4.34294462 : f32
    %24 = vector.broadcast %cst_11 : f32 to vector<24x128xf32>
    %25 = arith.mulf %24, %23 : vector<24x128xf32>
    %c0_12 = arith.constant 0 : index
    %c0_13 = arith.constant 0 : index
    %c0_14 = arith.constant 0 : index
    %26 = vector.load %arg5[%c0_12, %c0_13, %c0_14] : memref<1x24x128xf32, #tpu.memory_space<vmem>>, vector<1x24x128xf32>
    %27 = vector.shape_cast %26 : vector<1x24x128xf32> to vector<24x128xf32>
    %28 = vector.shape_cast %25 : vector<24x128xf32> to vector<1x24x128xf32>
    tpu.vector_store %arg5[%c0_12, %c0_13, %c0_14], %28 {strides = array<i32>} : memref<1x24x128xf32, #tpu.memory_space<vmem>>, vector<1x24x128xf32>,
    return
  }
  func.func @transform_0(%arg0: i32, %arg1: i32) -> (i32, i32, i32) {
    %c0_i32 = arith.constant 0 : i32
    %c0_i32_0 = arith.constant 0 : i32
    %c0_i32_1 = arith.constant 0 : i32
    return %arg0, %c0_i32, %c0_i32_0 : i32, i32, i32
  }
  func.func @transform_1(%arg0: i32, %arg1: i32) -> (i32, i32, i32) {
    %c0_i32 = arith.constant 0 : i32
    %c0_i32_0 = arith.constant 0 : i32
    %c0_i32_1 = arith.constant 0 : i32
    %c0_i32_2 = arith.constant 0 : i32
    return %c0_i32, %c0_i32_0, %c0_i32_1 : i32, i32, i32
  }
  func.func @transform_2(%arg0: i32, %arg1: i32) -> (i32, i32) {
    %c0_i32 = arith.constant 0 : i32
    %c0_i32_0 = arith.constant 0 : i32
    %c0_i32_1 = arith.constant 0 : i32
    return %c0_i32, %c0_i32_0 : i32, i32
  }
  func.func @transform_3(%arg0: i32, %arg1: i32) -> (i32, i32, i32) {
    %c0_i32 = arith.constant 0 : i32
    %c0_i32_0 = arith.constant 0 : i32
    return %arg0, %arg1, %c0_i32 : i32, i32, i32
  }
}

</mosaic_0001>

<llo_original>
// kernel: tpu_custom_call.1
$region0: #{tpu_custom_call.1}
  #allocation0 [shape = 'u32[]', space=smem, size = 0x4, offset = 0x4, fixed_abs, tag = 'smem constant byte address 0x4 - core index']
  #allocation1 [shape = 'u32[144,128]{1,0:T(1,128)}', space=vmem, size = 0x12000, scoped, tag = 'internal scratch']
  %s0 = inlined_call_operand.hbm [shape: f32[2,32,32], index: 0, kind: input, shape index: {}]
  %s1 = inlined_call_operand.hbm [shape: f32[2,32,256], index: 1, kind: input, shape index: {}]
  %s2 = inlined_call_operand.hbm [shape: f32[128,128], index: 2, kind: input, shape index: {}]
  %s3 = inlined_call_operand.hbm [shape: f32[2,24,128], index: 3, kind: output, shape index: {}]
  %s4 = sld [smem:[#allocation0]]
  $region57: #{tpu_custom_call.1} parent=0
    _
  %s6 = ssub.s32 1, %s4
  %s7 = scalar_select 0, %s6, %s4
  $region1: #{tpu_custom_call.1} parent=0
    #allocation2 [shape = 'u8[32768]{0}', space=vmem, size = 0x8000, scoped, tag = 'input window, operand 0']
    #allocation3 [shape = 's32[2]{0}', space=sflag, size = 0x8, scoped, tag = 'scoped memory for tpu_custom_call.1']
    #allocation4 [shape = 's32[2]{0}', space=sflag, size = 0x8, scoped, tag = 'scoped memory for tpu_custom_call.1']
    #allocation5 [shape = 'u8[65536]{0}', space=vmem, size = 0x10000, scoped, tag = 'input window, operand 1, single buffered']
    #allocation6 [shape = 's32[1]{0}', space=sflag, size = 0x4, scoped, tag = 'scoped memory for tpu_custom_call.1']
    #allocation7 [shape = 'u8[65536]{0}', space=vmem, size = 0x10000, scoped, tag = 'input window, operand 2, single buffered']
    #allocation8 [shape = 'u8[24576]{0}', space=vmem, size = 0x6000, scoped, tag = 'output window, operand 0']
    %8 = vsyncpa [#allocation3], 0
    %s9 = scalar_lea.sflag [#allocation3], 1
    %10 = vsyncpa %s9, 0
    %11 = vsyncpa [#allocation6], 0
    %12 = vsyncpa [#allocation4], 0
    %s13 = scalar_lea.sflag [#allocation4], 1
    %14 = vsyncpa %s13, 0
    loop: start=0, step=1, limit=4
    $region2: #{tpu_custom_call.1} parent=1 // loop_pre_header
      _
    $region3: #{tpu_custom_call.1} parent=1 // loop_header
      %s16 = sphi 0, %s20
      %p17 = scmp.ge.s32.totalorder %s16, 4
      %s23 = sphi 0, %s35
      %s24 = sphi 0, %s31
      %s25 = sphi 0, %s23
      %s26 = sphi 0, %s24
      %s27 = sphi 0, %s25
      %s28 = sphi 0, %s26
      %s38 = sphi 0, %s40
      %s41 = sphi 0, %s38
      %s42 = sphi 0, %s41
      %s58 = sphi 0, %s42
      %s62 = sphi 0, %s62
      %s64 = sphi 0, %s62
      %s65 = sphi 0, %s64
      %s79 = sphi 0, %s65
      %s83 = sphi 0, %s83
      %s85 = sphi 0, %s83
      %s86 = sphi 0, %s85
      %s100 = sphi 0, %s86
      %s108 = sphi 0, %s110
      %s111 = sphi 0, %s108
      %s112 = sphi 0, %s111
      %s128 = sphi 0, %s112
    $region4: #{tpu_custom_call.1} parent=1 // loop_header_branch
      %19 = sbr.rel (%p17) target = $region8
    $region5: #{tpu_custom_call.1} parent=1 // loop_body
      %s21 = ssub.s32 %s16, 1
      %s22 = ssub.s32 %s16, 2
      %s29 = sadd.s32 1, %s24
      %p30 = scmp.ge.s32.totalorder %s29, 1
      %s31 = scalar_select %p30, 0, %s29
      %s32 = sadd.s32 1, %s23
      %s33 = scalar_select %p30, %s32, %s23
      %p34 = scmp.ge.s32.totalorder %s33, 2
      %s35 = scalar_select %p34, 0, %s33
      %s36 = ssub.s32 %s23, %s35
      %p37 = scmp.eq.s32.totalorder %s36, 0
      %s39 = sadd.s32 %s38, 1
      %s40 = scalar_select %p37, %s38, %s39
      %p43 = pneg %p37
      %p44 = scmp.eq.s32.totalorder %s16, 1
      %p45 = por %p43, %p44
      %p46 = scmp.ne.s32.totalorder %s38, %s41
      %p47 = scmp.eq.s32.totalorder %s16, 0
      %p48 = por %p46, %p47
      %p49 = scmp.ne.s32.totalorder %s38, %s41
      %p50 = scmp.eq.s32.totalorder %s21, 1
      %p51 = por %p49, %p50
      %p52 = scmp.ne.s32.totalorder %s41, %s42
      %p53 = scmp.eq.s32.totalorder %s21, 0
      %p54 = por %p52, %p53
      %p55 = scmp.ne.s32.totalorder %s41, %s42
      %p56 = scmp.eq.s32.totalorder %s22, 1
      %p57 = por %p55, %p56
      %p59 = scmp.ne.s32.totalorder %s42, %s58
      %p60 = scmp.eq.s32.totalorder %s22, 0
      %p61 = por %p59, %p60
      %s63 = sadd.s32 %s62, 1
      %p66 = scmp.eq.s32.totalorder %s16, 1
      %p67 = scmp.ne.s32.totalorder %s62, %s64
      %p68 = scmp.eq.s32.totalorder %s16, 0
      %p69 = por %p67, %p68
      %p70 = scmp.ne.s32.totalorder %s62, %s64
      %p71 = scmp.eq.s32.totalorder %s21, 1
      %p72 = por %p70, %p71
      %p73 = scmp.ne.s32.totalorder %s64, %s65
      %p74 = scmp.eq.s32.totalorder %s21, 0
      %p75 = por %p73, %p74
      %p76 = scmp.ne.s32.totalorder %s64, %s65
      %p77 = scmp.eq.s32.totalorder %s22, 1
      %p78 = por %p76, %p77
      %p80 = scmp.ne.s32.totalorder %s65, %s79
      %p81 = scmp.eq.s32.totalorder %s22, 0
      %p82 = por %p80, %p81
      %s84 = sadd.s32 %s83, 1
      %p87 = scmp.eq.s32.totalorder %s16, 1
      %p88 = scmp.ne.s32.totalorder %s83, %s85
      %p89 = scmp.eq.s32.totalorder %s16, 0
      %p90 = por %p88, %p89
      %p91 = scmp.ne.s32.totalorder %s83, %s85
      %p92 = scmp.eq.s32.totalorder %s21, 1
      %p93 = por %p91, %p92
      %p94 = scmp.ne.s32.totalorder %s85, %s86
      %p95 = scmp.eq.s32.totalorder %s21, 0
      %p96 = por %p94, %p95
      %p97 = scmp.ne.s32.totalorder %s85, %s86
      %p98 = scmp.eq.s32.totalorder %s22, 1
      %p99 = por %p97, %p98
      %p101 = scmp.ne.s32.totalorder %s86, %s100
      %p102 = scmp.eq.s32.totalorder %s22, 0
      %p103 = por %p101, %p102
      %s104 = ssub.s32 %s23, %s35
      %s105 = ssub.s32 %s24, %s31
      %s106 = sor.u32 %s104, %s105
      %p107 = scmp.eq.s32.totalorder %s106, 0
      %s109 = sadd.s32 %s108, 1
      %s110 = scalar_select %p107, %s108, %s109
      %p113 = pneg %p107
      %p114 = scmp.eq.s32.totalorder %s16, 1
      %p115 = por %p113, %p114
      %p116 = scmp.ne.s32.totalorder %s108, %s111
      %p117 = scmp.eq.s32.totalorder %s16, 0
      %p118 = por %p116, %p117
      %p119 = scmp.ne.s32.totalorder %s108, %s111
      %p120 = scmp.eq.s32.totalorder %s21, 1
      %p121 = por %p119, %p120
      %p122 = scmp.ne.s32.totalorder %s111, %s112
      %p123 = scmp.eq.s32.totalorder %s21, 0
      %p124 = por %p122, %p123
      %p125 = scmp.ne.s32.totalorder %s111, %s112
      %p126 = scmp.eq.s32.totalorder %s22, 1
      %p127 = por %p125, %p126
      %p129 = scmp.ne.s32.totalorder %s112, %s128
      %p130 = scmp.eq.s32.totalorder %s22, 0
      %p131 = por %p129, %p130
      %p132 = scmp.le.s32.totalorder 1, %s16
      %p133 = scmp.lt.s32.totalorder %s16, 3
      %p134 = pnand %p132, %p133
      %p135 = pneg %p134
      // Predicated region
      $region9: #{tpu_custom_call.1} parent=5 // pred_check
        _
      $region10: #{tpu_custom_call.1} parent=5 // pred_check_branch
        %137 = sbr.rel (%p134) target = $region12
      $region11: #{tpu_custom_call.1} parent=5 // pred_region
        %s138 = ssub.s32 %s16, 1
        // Predicated region
        $region13: #{tpu_custom_call.1} parent=11 // pred_check
          %p139 = pneg %p75
        $region14: #{tpu_custom_call.1} parent=11 // pred_check_branch
          %141 = sbr.rel (%p139) target = $region16
        $region15: #{tpu_custom_call.1} parent=11 // pred_region
          %s143 = ssub.s32 2048, 2048
          %144 = vsyncadd [#allocation6], %s143
          %s145 = sshll.u32 [#allocation5], 4
          %s146 = int_to_ptr.vmem [resolvable:$true] %s145
          %151 = dma.hbm_to_vmem [thread:$0]  %s1, 2048, %s146, [#allocation6], 256, 256, 16
        $region16: #{tpu_custom_call.1} parent=11 // pred_fallthru
          _
        // Predicated region
        $region17: #{tpu_custom_call.1} parent=11 // pred_check
          %p152 = pneg %p96
        $region18: #{tpu_custom_call.1} parent=11 // pred_check_branch
          %154 = sbr.rel (%p152) target = $region20
        $region19: #{tpu_custom_call.1} parent=11 // pred_region
          %s156 = ssub.s32 2048, 2048
          %157 = vsyncadd [#allocation6], %s156
          %s158 = sshll.u32 [#allocation7], 4
          %s159 = int_to_ptr.vmem [resolvable:$true] %s158
          %164 = dma.hbm_to_vmem [thread:$0]  %s2, 2048, %s159, [#allocation6], 128, 128, 8
        $region20: #{tpu_custom_call.1} parent=11 // pred_fallthru
          _
      $region12: #{tpu_custom_call.1} parent=5 // pred_fallthru
        _
      %p165 = scmp.lt.s32.totalorder %s16, 2
      // Predicated region
      $region21: #{tpu_custom_call.1} parent=5 // pred_check
        %p166 = pneg %p165
      $region22: #{tpu_custom_call.1} parent=5 // pred_check_branch
        %168 = sbr.rel (%p166) target = $region24
      $region23: #{tpu_custom_call.1} parent=5 // pred_region
        // Predicated region
        $region25: #{tpu_custom_call.1} parent=23 // pred_check
          %p169 = pneg %p48
        $region26: #{tpu_custom_call.1} parent=23 // pred_check_branch
          %171 = sbr.rel (%p169) target = $region28
        $region27: #{tpu_custom_call.1} parent=23 // pred_region
          %s172 = sand.u32 %s38, 1
          %s173 = scalar_lea.sflag [#allocation3], %s172
          %s174 = sand.u32 %s38, 1
          %s175 = smul.addr %s174, 32
          %s176 = scalar_lea.vmem [#allocation2], %s175
          %s178 = ssub.s32 512, 512
          %179 = vsyncadd %s173, %s178
          %s180 = smul.addr %s23, 4
          %s181 = smul.addr %s180, 128
          %s182 = scalar_lea.hbm %s0, %s181
          %s183 = sshll.u32 %s176, 4
          %s184 = int_to_ptr.vmem [resolvable:$true] %s183
          %189 = dma.hbm_to_vmem [thread:$0]  %s182, 512, %s184, %s173, 128, 128, 8
        $region28: #{tpu_custom_call.1} parent=23 // pred_fallthru
          _
      $region24: #{tpu_custom_call.1} parent=5 // pred_fallthru
        _
      %p190 = scmp.le.s32.totalorder 1, %s16
      %p191 = scmp.lt.s32.totalorder %s16, 3
      %p192 = pnand %p190, %p191
      %p193 = pneg %p192
      // Predicated region
      $region29: #{tpu_custom_call.1} parent=5 // pred_check
        _
      $region30: #{tpu_custom_call.1} parent=5 // pred_check_branch
        %195 = sbr.rel (%p192) target = $region32
      $region31: #{tpu_custom_call.1} parent=5 // pred_region
        %s196 = ssub.s32 %s16, 1
        %s197 = sand.u32 %s41, 1
        %s198 = scalar_lea.sflag [#allocation3], %s197
        %s199 = sand.u32 %s41, 1
        %s200 = smul.addr %s199, 32
        %s201 = scalar_lea.vmem [#allocation2], %s200
        // Predicated region
        $region33: #{tpu_custom_call.1} parent=31 // pred_check
          %p202 = pneg %p54
        $region34: #{tpu_custom_call.1} parent=31 // pred_check_branch
          %204 = sbr.rel (%p202) target = $region36
        $region35: #{tpu_custom_call.1} parent=31 // pred_region
          %205 = dma.done %s198, 512
        $region36: #{tpu_custom_call.1} parent=31 // pred_fallthru
          _
        // Predicated region
        $region37: #{tpu_custom_call.1} parent=31 // pred_check
          %p206 = pneg %p75
        $region38: #{tpu_custom_call.1} parent=31 // pred_check_branch
          %208 = sbr.rel (%p206) target = $region40
        $region39: #{tpu_custom_call.1} parent=31 // pred_region
          %209 = dma.done [#allocation6], 2048
        $region40: #{tpu_custom_call.1} parent=31 // pred_fallthru
          _
        // Predicated region
        $region41: #{tpu_custom_call.1} parent=31 // pred_check
          %p210 = pneg %p96
        $region42: #{tpu_custom_call.1} parent=31 // pred_check_branch
          %212 = sbr.rel (%p210) target = $region44
        $region43: #{tpu_custom_call.1} parent=31 // pred_region
          %213 = dma.done [#allocation6], 2048
        $region44: #{tpu_custom_call.1} parent=31 // pred_fallthru
          _
        %s214 = sand.u32 %s41, 1
        %s215 = scalar_lea.sflag [#allocation3], %s214
        %s216 = sand.u32 %s41, 1
        %s217 = smul.addr %s216, 32
        %s218 = scalar_lea.vmem [#allocation2], %s217
        %p219 = pneg %p54
        %p220 = pneg %p51
        %p221 = pneg %p75
        %p222 = pneg %p72
        %p223 = pneg %p96
        %p224 = pneg %p93
        %p225 = pneg %p124
        %p226 = pneg %p121
        %s227 = sand.u32 %s111, 1
        %s228 = scalar_lea.sflag [#allocation4], %s227
        %s229 = sand.u32 %s111, 1
        %s230 = smul.addr %s229, 24
        %s231 = scalar_lea.vmem [#allocation8], %s230
        %s232 = smul.u32 3, %s26
        %s233 = smul.u32 %s26, 24
        %s234 = scalar_lea.vmem %s201, %s233 [#allocation2]
        %v235 = vld [vmem:[%s234] sm:$0xff]
        %v236 = vld [vmem:[%s234 + $0x8] sm:$0xff]
        %v237 = vld [vmem:[%s234 + $0x10] sm:$0xff]
        %v238 = vld [vmem:[%s234 + $0x18] sm:$0xff]
        %v239 = vld [vmem:[#allocation5] sm:$0xff]
        %v240 = vld [vmem:[#allocation5 + $0x8] sm:$0xff]
        %v241 = vld [vmem:[#allocation5 + $0x10] sm:$0xff]
        %v242 = vld [vmem:[#allocation5 + $0x18] sm:$0xff]
        %v243 = vld [vmem:[#allocation5 + $0x20] sm:$0xff]
        %v244 = vld [vmem:[#allocation5 + $0x28] sm:$0xff]
        %v245 = vld [vmem:[#allocation5 + $0x30] sm:$0xff]
        %v246 = vld [vmem:[#allocation5 + $0x38] sm:$0xff]
        %s247 = scalar_lea.vmem [#allocation5], 64
        %v248 = vld [vmem:[%s247] sm:$0xff]
        %v249 = vld [vmem:[%s247 + $0x8] sm:$0xff]
        %v250 = vld [vmem:[%s247 + $0x10] sm:$0xff]
        %v251 = vld [vmem:[%s247 + $0x18] sm:$0xff]
        %v252 = vld [vmem:[%s247 + $0x20] sm:$0xff]
        %v253 = vld [vmem:[%s247 + $0x28] sm:$0xff]
        %v254 = vld [vmem:[%s247 + $0x30] sm:$0xff]
        %v255 = vld [vmem:[%s247 + $0x38] sm:$0xff]
        %vm260 = vcmask 1046528
        %v261 = vrot.slane %v235, 1
        %v262 = vrot.slane %v236, 1
        %v263 = vsel %vm260, %v261, %v262
        %v264 = vrot.slane %v237, 1
        %v265 = vsel %vm260, %v262, %v264
        %v266 = vrot.slane %v238, 1
        %v267 = vsel %vm260, %v264, %v266
        %vm268 = vcmask 261120
        %v269 = vsel %vm268, %v263, 0
        %v271 = vsel %vm268, %v265, 0
        %v273 = vsel %vm268, %v267, 0
        %275 = vmatprep.subr.mxu0 %v249
        %276 = vmatpush1.msra.mxu0 %v248
        %277 = vmatprep.subr.mxu0 %v251
        %278 = vmatpush1.msra.mxu0 %v250
        %279 = vmatprep.subr.mxu0 %v253
        %280 = vmatpush1.msra.mxu0 %v252
        %281 = vmatprep.subr.mxu0 %v255
        %282 = vmatpush1.msra.mxu0 %v254
        %283 = vmatprep.subr.mxu0 0.0
        %284 = vmatpush1.msra.mxu0 0.0
        %285 = vmatprep.subr.mxu0 0.0
        %286 = vmatpush1.msra.mxu0 0.0
        %287 = vmatprep.subr.mxu0 0.0
        %288 = vmatpush1.msra.mxu0 0.0
        %289 = vmatprep.subr.mxu0 0.0
        %290 = vmatpush1.msra.mxu0 0.0
        %291 = vmatprep.subr.mxu0 0.0
        %292 = vmatpush1.msra.mxu0 0.0
        %293 = vmatprep.subr.mxu0 0.0
        %294 = vmatpush1.msra.mxu0 0.0
        %295 = vmatprep.subr.mxu0 0.0
        %296 = vmatpush1.msra.mxu0 0.0
        %297 = vmatprep.subr.mxu0 0.0
        %298 = vmatpush1.msra.mxu0 0.0
        %299 = vmatprep.subr.mxu0 0.0
        %300 = vmatpush1.msra.mxu0 0.0
        %301 = vmatprep.subr.mxu0 0.0
        %302 = vmatpush1.msra.mxu0 0.0
        %303 = vmatprep.subr.mxu0 0.0
        %304 = vmatpush1.msra.mxu0 0.0
        %305 = vmatprep.subr.mxu0 0.0
        %306 = vmatpush1.msra.mxu0 0.0
        %307 = vmatprep.subr.mxu0 0.0
        %308 = vmatpush1.msra.mxu0 0.0
        %309 = vmatprep.subr.mxu0 0.0
        %310 = vmatpush1.msra.mxu0 0.0
        %311 = vmatprep.subr.mxu0 0.0
        %312 = vmatpush1.msra.mxu0 0.0
        %313 = vmatprep.subr.mxu0 0.0
        %314 = vmatpush1.msra.mxu0 0.0
        %315 = vmatprep.subr.mxu0 0.0
        %316 = vmatpush1.msra.mxu0 0.0
        %317 = vmatprep.subr.mxu0 0.0
        %318 = vmatpush1.msra.mxu0 0.0
        %319 = vmatprep.subr.mxu0 0.0
        %320 = vmatpush1.msra.mxu0 0.0
        %321 = vmatprep.subr.mxu0 0.0
        %322 = vmatpush1.msra.mxu0 0.0
        %323 = vmatprep.subr.mxu0 0.0
        %324 = vmatpush1.msra.mxu0 0.0
        %325 = vmatprep.subr.mxu0 0.0
        %326 = vmatpush1.msra.mxu0 0.0
        %327 = vmatprep.subr.mxu0 0.0
        %328 = vmatpush1.msra.mxu0 0.0
        %329 = vmatprep.subr.mxu0 0.0
        %330 = vmatpush1.msra.mxu0 0.0
        %331 = vmatprep.subr.mxu0 0.0
        %332 = vmatpush1.msra.mxu0 0.0
        %333 = vmatprep.subr.mxu0 0.0
        %334 = vmatpush1.msra.mxu0 0.0
        %335 = vmatprep.subr.mxu0 0.0
        %336 = vmatpush1.msra.mxu0 0.0
        %337 = vmatprep.subr.mxu0 0.0
        %338 = vmatpush1.msra.mxu0 0.0
        %339 = vmatprep.mubr.f32.mxu0 0.0
        %340 = vmatmul.mubr.f32.gmra.mrb[0].mxu0 %v269
        %v341 = vpop.f32.mrb[0].mxu0
        %v342 = vadd.f32 0.0, %v341
        %v343 = vpop.f32.mrb[0].mxu0
        %v344 = vadd.f32 0.0, %v343
        %345 = vmatprep.mubr.f32.mxu0 0.0
        %346 = vmatmul.mubr.f32.gmra.mrb[0].mxu0 %v271
        %v347 = vpop.f32.mrb[0].mxu0
        %v348 = vadd.f32 0.0, %v347
        %v349 = vpop.f32.mrb[0].mxu0
        %v350 = vadd.f32 0.0, %v349
        %351 = vmatprep.mubr.f32.mxu0 0.0
        %352 = vmatmul.mubr.f32.gmra.mrb[0].mxu0 %v273
        %v353 = vpop.f32.mrb[0].mxu0
        %v354 = vadd.f32 0.0, %v353
        %v355 = vpop.f32.mrb[0].mxu0
        %v356 = vadd.f32 0.0, %v355
        %357 = vdwg.mxu0
        %v358 = vsel %vm268, %v235, 0
        %v360 = vsel %vm268, %v236, 0
        %v362 = vsel %vm268, %v237, 0
        %364 = vmatprep.subr.mxu0 %v240
        %365 = vmatpush1.msra.mxu0 %v239
        %366 = vmatprep.subr.mxu0 %v242
        %367 = vmatpush1.msra.mxu0 %v241
        %368 = vmatprep.subr.mxu0 %v244
        %369 = vmatpush1.msra.mxu0 %v243
        %370 = vmatprep.subr.mxu0 %v246
        %371 = vmatpush1.msra.mxu0 %v245
        %372 = vmatprep.subr.mxu0 0.0
        %373 = vmatpush1.msra.mxu0 0.0
        %374 = vmatprep.subr.mxu0 0.0
        %375 = vmatpush1.msra.mxu0 0.0
        %376 = vmatprep.subr.mxu0 0.0
        %377 = vmatpush1.msra.mxu0 0.0
        %378 = vmatprep.subr.mxu0 0.0
        %379 = vmatpush1.msra.mxu0 0.0
        %380 = vmatprep.subr.mxu0 0.0
        %381 = vmatpush1.msra.mxu0 0.0
        %382 = vmatprep.subr.mxu0 0.0
        %383 = vmatpush1.msra.mxu0 0.0
        %384 = vmatprep.subr.mxu0 0.0
        %385 = vmatpush1.msra.mxu0 0.0
        %386 = vmatprep.subr.mxu0 0.0
        %387 = vmatpush1.msra.mxu0 0.0
        %388 = vmatprep.subr.mxu0 0.0
        %389 = vmatpush1.msra.mxu0 0.0
        %390 = vmatprep.subr.mxu0 0.0
        %391 = vmatpush1.msra.mxu0 0.0
        %392 = vmatprep.subr.mxu0 0.0
        %393 = vmatpush1.msra.mxu0 0.0
        %394 = vmatprep.subr.mxu0 0.0
        %395 = vmatpush1.msra.mxu0 0.0
        %396 = vmatprep.subr.mxu0 0.0
        %397 = vmatpush1.msra.mxu0 0.0
        %398 = vmatprep.subr.mxu0 0.0
        %399 = vmatpush1.msra.mxu0 0.0
        %400 = vmatprep.subr.mxu0 0.0
        %401 = vmatpush1.msra.mxu0 0.0
        %402 = vmatprep.subr.mxu0 0.0
        %403 = vmatpush1.msra.mxu0 0.0
        %404 = vmatprep.subr.mxu0 0.0
        %405 = vmatpush1.msra.mxu0 0.0
        %406 = vmatprep.subr.mxu0 0.0
        %407 = vmatpush1.msra.mxu0 0.0
        %408 = vmatprep.subr.mxu0 0.0
        %409 = vmatpush1.msra.mxu0 0.0
        %410 = vmatprep.subr.mxu0 0.0
        %411 = vmatpush1.msra.mxu0 0.0
        %412 = vmatprep.subr.mxu0 0.0
        %413 = vmatpush1.msra.mxu0 0.0
        %414 = vmatprep.subr.mxu0 0.0
        %415 = vmatpush1.msra.mxu0 0.0
        %416 = vmatprep.subr.mxu0 0.0
        %417 = vmatpush1.msra.mxu0 0.0
        %418 = vmatprep.subr.mxu0 0.0
        %419 = vmatpush1.msra.mxu0 0.0
        %420 = vmatprep.subr.mxu0 0.0
        %421 = vmatpush1.msra.mxu0 0.0
        %422 = vmatprep.subr.mxu0 0.0
        %423 = vmatpush1.msra.mxu0 0.0
        %424 = vmatprep.subr.mxu0 0.0
        %425 = vmatpush1.msra.mxu0 0.0
        %426 = vmatprep.subr.mxu0 0.0
        %427 = vmatpush1.msra.mxu0 0.0
        %428 = vmatprep.mubr.f32.mxu0 0.0
        %429 = vmatmul.mubr.f32.gmra.mrb[0].mxu0 %v358
        %v430 = vpop.f32.mrb[0].mxu0
        %v431 = vadd.f32 %v342, %v430
        %v432 = vpop.f32.mrb[0].mxu0
        %v433 = vadd.f32 %v344, %v432
        %434 = vmatprep.mubr.f32.mxu0 0.0
        %435 = vmatmul.mubr.f32.gmra.mrb[0].mxu0 %v360
        %v436 = vpop.f32.mrb[0].mxu0
        %v437 = vadd.f32 %v348, %v436
        %v438 = vpop.f32.mrb[0].mxu0
        %v439 = vadd.f32 %v350, %v438
        %440 = vmatprep.mubr.f32.mxu0 0.0
        %441 = vmatmul.mubr.f32.gmra.mrb[0].mxu0 %v362
        %v442 = vpop.f32.mrb[0].mxu0
        %v443 = vadd.f32 %v354, %v442
        %v444 = vpop.f32.mrb[0].mxu0
        %v445 = vadd.f32 %v356, %v444
        %446 = vdwg.mxu0
        %v447 = vmul.f32 %v431, %v431
        %v448 = vmul.f32 %v437, %v437
        %v449 = vmul.f32 %v443, %v443
        %v450 = vmul.f32 %v433, %v433
        %v451 = vmul.f32 %v439, %v439
        %v452 = vmul.f32 %v445, %v445
        %v453 = vadd.f32 %v447, %v450
        %v454 = vadd.f32 %v448, %v451
        %v455 = vadd.f32 %v449, %v452
        %v456 = vld [vmem:[#allocation7] sm:$0xff]
        %v457 = vld [vmem:[#allocation7 + $0x8] sm:$0xff]
        %v458 = vld [vmem:[#allocation7 + $0x10] sm:$0xff]
        %v459 = vld [vmem:[#allocation7 + $0x18] sm:$0xff]
        %v460 = vld [vmem:[#allocation7 + $0x20] sm:$0xff]
        %v461 = vld [vmem:[#allocation7 + $0x28] sm:$0xff]
        %v462 = vld [vmem:[#allocation7 + $0x30] sm:$0xff]
        %v463 = vld [vmem:[#allocation7 + $0x38] sm:$0xff]
        %v464 = vld [vmem:[#allocation7 + $0x40] sm:$0xff]
        %v465 = vld [vmem:[#allocation7 + $0x48] sm:$0xff]
        %v466 = vld [vmem:[#allocation7 + $0x50] sm:$0xff]
        %v467 = vld [vmem:[#allocation7 + $0x58] sm:$0xff]
        %v468 = vld [vmem:[#allocation7 + $0x60] sm:$0xff]
        %v469 = vld [vmem:[#allocation7 + $0x68] sm:$0xff]
        %v470 = vld [vmem:[#allocation7 + $0x70] sm:$0xff]
        %v471 = vld [vmem:[#allocation7 + $0x78] sm:$0xff]
        %472 = vmatprep.subr.mxu0 0.0
        %473 = vmatpush1.msra.mxu0 %v456
        %474 = vmatprep.subr.mxu0 0.0
        %475 = vmatpush1.msra.mxu0 %v457
        %476 = vmatprep.subr.mxu0 0.0
        %477 = vmatpush1.msra.mxu0 %v458
        %478 = vmatprep.subr.mxu0 0.0
        %479 = vmatpush1.msra.mxu0 %v459
        %480 = vmatprep.subr.mxu0 0.0
        %481 = vmatpush1.msra.mxu0 %v460
        %482 = vmatprep.subr.mxu0 0.0
        %483 = vmatpush1.msra.mxu0 %v461
        %484 = vmatprep.subr.mxu0 0.0
        %485 = vmatpush1.msra.mxu0 %v462
        %486 = vmatprep.subr.mxu0 0.0
        %487 = vmatpush1.msra.mxu0 %v463
        %488 = vmatprep.subr.mxu0 0.0
        %489 = vmatpush1.msra.mxu0 %v464
        %490 = vmatprep.subr.mxu0 0.0
        %491 = vmatpush1.msra.mxu0 %v465
        %492 = vmatprep.subr.mxu0 0.0
        %493 = vmatpush1.msra.mxu0 %v466
        %494 = vmatprep.subr.mxu0 0.0
        %495 = vmatpush1.msra.mxu0 %v467
        %496 = vmatprep.subr.mxu0 0.0
        %497 = vmatpush1.msra.mxu0 %v468
        %498 = vmatprep.subr.mxu0 0.0
        %499 = vmatpush1.msra.mxu0 %v469
        %500 = vmatprep.subr.mxu0 0.0
        %501 = vmatpush1.msra.mxu0 %v470
        %502 = vmatprep.subr.mxu0 0.0
        %503 = vmatpush1.msra.mxu0 %v471
        %504 = vmatprep.subr.mxu0 0.0
        %505 = vmatpush1.msra.mxu0 0.0
        %506 = vmatprep.subr.mxu0 0.0
        %507 = vmatpush1.msra.mxu0 0.0
        %508 = vmatprep.subr.mxu0 0.0
        %509 = vmatpush1.msra.mxu0 0.0
        %510 = vmatprep.subr.mxu0 0.0
        %511 = vmatpush1.msra.mxu0 0.0
        %512 = vmatprep.subr.mxu0 0.0
        %513 = vmatpush1.msra.mxu0 0.0
        %514 = vmatprep.subr.mxu0 0.0
        %515 = vmatpush1.msra.mxu0 0.0
        %516 = vmatprep.subr.mxu0 0.0
        %517 = vmatpush1.msra.mxu0 0.0
        %518 = vmatprep.subr.mxu0 0.0
        %519 = vmatpush1.msra.mxu0 0.0
        %520 = vmatprep.subr.mxu0 0.0
        %521 = vmatpush1.msra.mxu0 0.0
        %522 = vmatprep.subr.mxu0 0.0
        %523 = vmatpush1.msra.mxu0 0.0
        %524 = vmatprep.subr.mxu0 0.0
        %525 = vmatpush1.msra.mxu0 0.0
        %526 = vmatprep.subr.mxu0 0.0
        %527 = vmatpush1.msra.mxu0 0.0
        %528 = vmatprep.subr.mxu0 0.0
        %529 = vmatpush1.msra.mxu0 0.0
        %530 = vmatprep.subr.mxu0 0.0
        %531 = vmatpush1.msra.mxu0 0.0
        %532 = vmatprep.subr.mxu0 0.0
        %533 = vmatpush1.msra.mxu0 0.0
        %534 = vmatprep.subr.mxu0 0.0
        %535 = vmatpush1.msra.mxu0 0.0
        %536 = vmatprep.mubr.f32.mxu0 0.0
        %537 = vmatmul.mubr.f32.gmra.mrb[0].mxu0 %v453
        %v538 = vpop.f32.mrb[0].mxu0
        %v539 = vadd.f32 0.0, %v538
        %v540 = vpop.f32.mrb[0].mxu0
        %541 = vmatprep.mubr.f32.mxu0 0.0
        %542 = vmatmul.mubr.f32.gmra.mrb[0].mxu0 %v454
        %v543 = vpop.f32.mrb[0].mxu0
        %v544 = vadd.f32 0.0, %v543
        %v545 = vpop.f32.mrb[0].mxu0
        %546 = vmatprep.mubr.f32.mxu0 0.0
        %547 = vmatmul.mubr.f32.gmra.mrb[0].mxu0 %v455
        %v548 = vpop.f32.mrb[0].mxu0
        %v549 = vadd.f32 0.0, %v548
        %v550 = vpop.f32.mrb[0].mxu0
        %551 = vdwg.mxu0
        %v552 = vmax.f32 %v539, 1e-10
        %v553 = vmax.f32 %v544, 1e-10
        %v554 = vmax.f32 %v549, 1e-10
        %v555 = vlog2.pop %v552
        %v556 = vmul.f32 %v555, 0.6931472
        %v557 = vlog2.pop %v553
        %v558 = vmul.f32 %v557, 0.6931472
        %v559 = vlog2.pop %v554
        %v560 = vmul.f32 %v559, 0.6931472
        %v561 = vmul.f32 %v556, 4.3429446
        %v562 = vmul.f32 %v558, 4.3429446
        %v563 = vmul.f32 %v560, 4.3429446
        %564 = vst [vmem:[%s231] sm:$0xff] %v561
        %565 = vst [vmem:[%s231 + $0x8] sm:$0xff] %v562
        %566 = vst [vmem:[%s231 + $0x10] sm:$0xff] %v563
        %s567 = sand.u32 %s111, 1
        %s568 = scalar_lea.sflag [#allocation4], %s567
        %s569 = sand.u32 %s111, 1
        %s570 = smul.addr %s569, 24
        %s571 = scalar_lea.vmem [#allocation8], %s570
        // Predicated region
        $region45: #{tpu_custom_call.1} parent=31 // pred_check
          %p572 = pneg %p121
        $region46: #{tpu_custom_call.1} parent=31 // pred_check_branch
          %574 = sbr.rel (%p572) target = $region48
        $region47: #{tpu_custom_call.1} parent=31 // pred_region
          %s575 = smul.u32 3, %s26
          %s577 = ssub.s32 384, 384
          %578 = vsyncadd %s568, %s577
          %s579 = smul.addr %s25, 3
          %s580 = sadd.s32 %s575, %s579
          %s581 = smul.addr %s580, 128
          %s582 = scalar_lea.hbm %s3, %s581
          %s583 = sshll.u32 %s571, 4
          %s584 = int_to_ptr.vmem [resolvable:$true] %s583
          %589 = dma.vmem_to_hbm [thread:$0]  %s584, 384, %s582, %s568, 128, 128, 8
        $region48: #{tpu_custom_call.1} parent=31 // pred_fallthru
          _
      $region32: #{tpu_custom_call.1} parent=5 // pred_fallthru
        _
      %p590 = scmp.le.s32.totalorder 2, %s16
      // Predicated region
      $region49: #{tpu_custom_call.1} parent=5 // pred_check
        %p591 = pneg %p590
      $region50: #{tpu_custom_call.1} parent=5 // pred_check_branch
        %593 = sbr.rel (%p591) target = $region52
      $region51: #{tpu_custom_call.1} parent=5 // pred_region
        %s594 = ssub.s32 %s16, 2
        // Predicated region
        $region53: #{tpu_custom_call.1} parent=51 // pred_check
          %p595 = pneg %p127
        $region54: #{tpu_custom_call.1} parent=51 // pred_check_branch
          %597 = sbr.rel (%p595) target = $region56
        $region55: #{tpu_custom_call.1} parent=51 // pred_region
          %s598 = sand.u32 %s112, 1
          %s599 = scalar_lea.sflag [#allocation4], %s598
          %s600 = sand.u32 %s112, 1
          %s601 = smul.addr %s600, 24
          %s602 = scalar_lea.vmem [#allocation8], %s601
          %603 = dma.done %s599, 384
        $region56: #{tpu_custom_call.1} parent=51 // pred_fallthru
          _
      $region52: #{tpu_custom_call.1} parent=5 // pred_fallthru
        _
    $region6: #{tpu_custom_call.1} parent=1 // loop_footer
      %s20 = sadd.s32 1, %s16
    $region7: #{tpu_custom_call.1} parent=1 // loop_footer_branch
      %15 = sbr.rel target = $region3
    $region8: #{tpu_custom_call.1} parent=1 // loop_exit
      _
    %604 = vsyncpa [#allocation3], 1
    %s605 = scalar_lea.sflag [#allocation3], 1
    %606 = vsyncpa %s605, 1
    %607 = vsyncpa [#allocation6], 1
    %608 = vsyncpa [#allocation4], 1
    %s609 = scalar_lea.sflag [#allocation4], 1
    %610 = vsyncpa %s609, 1

</llo_original>
